<compile_context>
chip_gen: v6e
topology: v6e:2x2x1
jax: 0.10.0
libtpu: 0.0.40
codegen_flags: <defaults>
</compile_context>

<pallas_src>
import jax
import jax.numpy as jnp
from jax.experimental import pallas as pl
from jax.experimental.pallas import tpu as pltpu

LANES = 128
SUBLANES = 8
MAX_BLOCK_BYTES_PER_INPUT = 2 * 1024 * 1024   # ~2 MiB per input per grid step
VMEM_LIMIT_BYTES = 48 * 1024 * 1024           # covers 2 in x 2 bufs + f32 temps on all gens
SMALL_INPUT_ELEMS = 1 << 20                   # below this, plain XLA is strictly faster


def _detect_num_cores() -> int:
    """TensorCores reachable from one grid 'parallel' axis on this chip."""
    try:
        kind = jax.devices()[0].device_kind.lower()
    except Exception:  # pragma: no cover - non-TPU / query failure
        return 1
    # v7x has 2 TCs per chip; v4 megacore exposes 2 TCs per device.  v5e/v6e
    # are single-TC, where a core axis of 2 only adds duplicate clamped DMAs.
    if "v7" in kind or "7x" in kind or "v4" in kind:
        return 2
    return 1


def _mse_partial_kernel(p_ref, t_ref, o_ref, *, valid_rows, tiles_per_core,
                        tile_rows, needs_mask):
    c = pl.program_id(0)   # core-parallel axis
    j = pl.program_id(1)   # reduction axis (row tiles owned by this core)

    @pl.when(j == 0)
    def _():
        o_ref[...] = jnp.zeros_like(o_ref)

    def compute_sq():
        d = p_ref[...].astype(jnp.float32) - t_ref[...].astype(jnp.float32)
        return d * d

    def accumulate(sq):
        if tile_rows % SUBLANES == 0:
            # Fold (tile_rows, 128) -> (8, 128): pure VPU vreg adds, no XLU.
            o_ref[0, :, :] += sq.reshape(
                tile_rows // SUBLANES, SUBLANES, LANES).sum(axis=0)
        else:
            # Tiny-input fallback (tile_rows < 8, block equals full array dim).
            o_ref[0, 0:tile_rows, :] += sq

    if not needs_mask:
        # Common case: every tile is fully valid -> minimal VPU op count.
        accumulate(compute_sq())
    else:
        row0 = (c * tiles_per_core + j) * tile_rows

        # Interior tiles: no masking at all.
        @pl.when(row0 + tile_rows <= valid_rows)
        def _():
            accumulate(compute_sq())

        # Boundary tile only: mask rows past the logical end BEFORE the fold.
        # Pure-duplicate / overflow tiles (row0 >= valid_rows) are skipped.
        @pl.when(jnp.logical_and(row0 < valid_rows,
                                 row0 + tile_rows > valid_rows))
        def _():
            local_row = jax.lax.broadcasted_iota(
                jnp.int32, (tile_rows, LANES), 0)
            mask = local_row < (valid_rows - row0)
            accumulate(jnp.where(mask, compute_sq(), 0.0))


def mse_loss_pallas(pred: jax.Array, true: jax.Array,
                    *, force_pallas: bool = False) -> jax.Array:
    """Equivalent of nn.MSELoss()(pred, true): mean((pred - true)**2)."""
    assert pred.shape == true.shape, "MSELoss requires matching shapes"
    n_elems = pred.size

    if n_elems == 0:
        return jnp.float32(jnp.nan)

    # Small-input fast path: kernel launch + grid overhead dominates here.
    if not force_pallas and n_elems < SMALL_INPUT_ELEMS:
        d = pred.astype(jnp.float32) - true.astype(jnp.float32)
        return jnp.mean(d * d)

    # Flatten in the original dtype (free for contiguous arrays).
    p_flat = pred.reshape(-1)
    t_flat = true.reshape(-1)

    # Ragged tail (N % 128 != 0): sum the < 128-element tail in plain JAX
    # instead of jnp.pad-copying both full tensors.
    main = (n_elems // LANES) * LANES
    tail_sse = None
    if main != n_elems:
        dp = (p_flat[main:].astype(jnp.float32)
              - t_flat[main:].astype(jnp.float32))
        tail_sse = jnp.sum(dp * dp)
        p_flat = p_flat[:main]
        t_flat = t_flat[:main]

    if main == 0:
        # Entire input is smaller than one lane row.
        return (tail_sse / jnp.float32(n_elems)).astype(jnp.float32)

    rows = main // LANES
    p2d = p_flat.reshape(rows, LANES)
    t2d = t_flat.reshape(rows, LANES)

    # Dtype-aware packing (sublane groups) and HBM-roofline tile sizing.
    itemsize_p = jnp.dtype(pred.dtype).itemsize
    itemsize_t = jnp.dtype(true.dtype).itemsize
    max_itemsize = max(itemsize_p, itemsize_t, 1)
    pack = SUBLANES * max(1, 4 // min(itemsize_p, itemsize_t, 4))  # f32:8 bf16:16 i8:32
    max_tile_rows = max(pack,
                        (MAX_BLOCK_BYTES_PER_INPUT // (LANES * max_itemsize))
                        // pack * pack)

    if rows >= pack:
        tile_rows = min(max_tile_rows, (rows // pack) * pack)
    else:
        tile_rows = rows   # block equals full array dim

    num_row_blocks = pl.cdiv(rows, tile_rows)
    num_cores = max(1, min(_detect_num_cores(), num_row_blocks))
    tiles_per_core = pl.cdiv(num_row_blocks, num_cores)
    needs_mask = (num_row_blocks * tile_rows != rows) or (
        num_cores * tiles_per_core != num_row_blocks)

    def in_map(c, j):
        # Clamp so overflow tiles re-read the last valid block; those tiles are
        # skipped (or masked) in-kernel, so nothing is double counted.
        return (jnp.minimum(c * tiles_per_core + j, num_row_blocks - 1), 0)

    def kernel(p_ref, t_ref, o_ref):
        _mse_partial_kernel(p_ref, t_ref, o_ref,
                            valid_rows=rows,
                            tiles_per_core=tiles_per_core,
                            tile_rows=tile_rows,
                            needs_mask=needs_mask)

    cost = pl.CostEstimate(
        flops=3 * main,
        transcendentals=0,
        bytes_accessed=main * (itemsize_p + itemsize_t)
        + num_cores * SUBLANES * LANES * 4,
    )

    # TODO(synk): on v7x, verify with a profile that the leading "parallel"
    # axis shards across both TensorCores; if not, switch it to
    # pltpu.CORE_PARALLEL (or pl.core_map + create_tensorcore_mesh).
    partials = pl.pallas_call(
        kernel,
        out_shape=jax.ShapeDtypeStruct((num_cores, SUBLANES, LANES),
                                       jnp.float32),
        grid_spec=pltpu.PrefetchScalarGridSpec(
            num_scalar_prefetch=0,
            grid=(num_cores, tiles_per_core),
            in_specs=[
                pl.BlockSpec((tile_rows, LANES), in_map),
                pl.BlockSpec((tile_rows, LANES), in_map),
            ],
            out_specs=pl.BlockSpec((1, SUBLANES, LANES),
                                   lambda c, j: (c, 0, 0)),
        ),
        compiler_params=pltpu.CompilerParams(
            dimension_semantics=("parallel", "arbitrary"),
            vmem_limit_bytes=VMEM_LIMIT_BYTES,
        ),
        cost_estimate=cost,
    )(p2d, t2d)

    # Final cross-lane reduction of the (num_cores, 8, 128) partial sums.
    sse = jnp.sum(partials)
    if tail_sse is not None:
        sse = sse + tail_sse
    return (sse / jnp.float32(n_elems)).astype(jnp.float32)


class RegressionLossPallas:
    """Mirror of the PyTorch RegressionLoss module (rank is ignored on TPU)."""

    def __init__(self, **kwargs):
        self.task_name = kwargs["task"]

    def __call__(self, batch, *, force_pallas: bool = False):
        return mse_loss_pallas(
            batch[f"{self.task_name}/pred"],
            batch[f"{self.task_name}/true"],
            force_pallas=force_pallas,
        )


if __name__ == "__main__":
    key = jax.random.PRNGKey(0)
    k_pred, k_true, k_p2, k_t2 = jax.random.split(key, 4)

    # Small NCHW-shaped regression outputs (layout irrelevant for MSE).
    shape = (2, 4, 16, 16)
    pred = jax.random.normal(k_pred, shape, dtype=jnp.float32)
    true = jax.random.normal(k_true, shape, dtype=jnp.float32)

    loss_fn = RegressionLossPallas(task="depth", rank=0)
    batch = {"depth/pred": pred, "depth/true": true}

    # Force the Pallas path so the kernel actually runs at this small size.
    loss_kernel = jax.block_until_ready(loss_fn(batch, force_pallas=True))
    # Default (auto) path takes the small-input fast path.
    loss_auto = jax.block_until_ready(loss_fn(batch))

    ref = jnp.mean((pred - true) ** 2)
    assert jnp.allclose(loss_kernel, ref, rtol=1e-5, atol=1e-6), (loss_kernel, ref)
    assert jnp.allclose(loss_auto, ref, rtol=1e-5, atol=1e-6), (loss_auto, ref)

    # Ragged-size check: exercises boundary-tile masking + plain-JAX tail.
    shape2 = (3, 5, 7, 11)   # 1155 elements, not a multiple of 128
    p2 = jax.random.normal(k_p2, shape2, dtype=jnp.float32)
    t2 = jax.random.normal(k_t2, shape2, dtype=jnp.float32)
    loss2 = jax.block_until_ready(mse_loss_pallas(p2, t2, force_pallas=True))
    ref2 = jnp.mean((p2 - t2) ** 2)
    assert jnp.allclose(loss2, ref2, rtol=1e-5, atol=1e-6), (loss2, ref2)

    print("KERNEL_OK")
</pallas_src>

<mosaic_0001>
module attributes {stable_mosaic.version = 11 : i64} {
  func.func @kernel(%arg0: i32, %arg1: i32, %arg2: memref<16x128xf32, #tpu.memory_space<vmem>>, %arg3: memref<16x128xf32, #tpu.memory_space<vmem>>, %arg4: memref<1x8x128xf32, #tpu.memory_space<vmem>>) attributes {dimension_semantics = [#tpu.dimension_semantics<parallel>, #tpu.dimension_semantics<arbitrary>], iteration_bounds = array<i64: 1, 1>, scalar_prefetch = 0 : i64, scratch_operands = 0 : i64, tpu.core_type = #tpu.core_type<tc>, window_params = [{transform_indices = @transform_0, window_bounds = array<i64: 16, 128>}, {transform_indices = @transform_1, window_bounds = array<i64: 16, 128>}, {transform_indices = @transform_2, window_bounds = array<i64: 1, 8, 128>}]} {
    %c0_i32 = arith.constant 0 : i32
    %0 = arith.cmpi eq, %arg1, %c0_i32 : i32
    %1 = arith.extui %0 : i1 to i32
    %c0_i32_0 = arith.constant 0 : i32
    %2 = arith.cmpi ne, %1, %c0_i32_0 : i32
    scf.if %2 {
      %cst_10 = arith.constant 0.000000e+00 : f32
      %15 = vector.broadcast %cst_10 : f32 to vector<1x8x128xf32>
      %c0_11 = arith.constant 0 : index
      %c0_12 = arith.constant 0 : index
      %c0_13 = arith.constant 0 : index
      %16 = vector.load %arg4[%c0_11, %c0_12, %c0_13] : memref<1x8x128xf32, #tpu.memory_space<vmem>>, vector<1x8x128xf32>
      tpu.vector_store %arg4[%c0_11, %c0_12, %c0_13], %15 {strides = array<i32>} : memref<1x8x128xf32, #tpu.memory_space<vmem>>, vector<1x8x128xf32>,
    } else {
    }
    %c0 = arith.constant 0 : index
    %c0_1 = arith.constant 0 : index
    %3 = vector.load %arg2[%c0, %c0_1] : memref<16x128xf32, #tpu.memory_space<vmem>>, vector<16x128xf32>
    %c0_2 = arith.constant 0 : index
    %c0_3 = arith.constant 0 : index
    %4 = vector.load %arg3[%c0_2, %c0_3] : memref<16x128xf32, #tpu.memory_space<vmem>>, vector<16x128xf32>
    %5 = arith.subf %3, %4 : vector<16x128xf32>
    %6 = arith.mulf %5, %5 : vector<16x128xf32>
    %c0_4 = arith.constant 0 : index
    %c0_5 = arith.constant 0 : index
    %c0_6 = arith.constant 0 : index
    %7 = vector.load %arg4[%c0_4, %c0_5, %c0_6] : memref<1x8x128xf32, #tpu.memory_space<vmem>>, vector<1x8x128xf32>
    %8 = vector.shape_cast %7 : vector<1x8x128xf32> to vector<8x128xf32>
    %9 = vector.shape_cast %6 : vector<16x128xf32> to vector<2x8x128xf32>
    %cst = arith.constant dense<0.000000e+00> : vector<8x128xf32>
    %10 = vector.multi_reduction <add>, %9, %cst [0] : vector<2x8x128xf32> to vector<8x128xf32>
    %11 = arith.addf %8, %10 : vector<8x128xf32>
    %c0_7 = arith.constant 0 : index
    %c0_8 = arith.constant 0 : index
    %c0_9 = arith.constant 0 : index
    %12 = vector.load %arg4[%c0_7, %c0_8, %c0_9] : memref<1x8x128xf32, #tpu.memory_space<vmem>>, vector<1x8x128xf32>
    %13 = vector.shape_cast %12 : vector<1x8x128xf32> to vector<8x128xf32>
    %14 = vector.shape_cast %11 : vector<8x128xf32> to vector<1x8x128xf32>
    tpu.vector_store %arg4[%c0_7, %c0_8, %c0_9], %14 {strides = array<i32>} : memref<1x8x128xf32, #tpu.memory_space<vmem>>, vector<1x8x128xf32>,
    return
  }
  func.func @transform_0(%arg0: i32, %arg1: i32) -> (i32, i32) {
    %c1_i32 = arith.constant 1 : i32
    %0 = arith.muli %arg0, %c1_i32 : i32
    %1 = arith.addi %0, %arg1 : i32
    %c0_i32 = arith.constant 0 : i32
    %2 = arith.minsi %1, %c0_i32 : i32
    %c0_i32_0 = arith.constant 0 : i32
    %c0_i32_1 = arith.constant 0 : i32
    return %2, %c0_i32_0 : i32, i32
  }
  func.func @transform_1(%arg0: i32, %arg1: i32) -> (i32, i32) {
    %c1_i32 = arith.constant 1 : i32
    %0 = arith.muli %arg0, %c1_i32 : i32
    %1 = arith.addi %0, %arg1 : i32
    %c0_i32 = arith.constant 0 : i32
    %2 = arith.minsi %1, %c0_i32 : i32
    %c0_i32_0 = arith.constant 0 : i32
    %c0_i32_1 = arith.constant 0 : i32
    return %2, %c0_i32_0 : i32, i32
  }
  func.func @transform_2(%arg0: i32, %arg1: i32) -> (i32, i32, i32) {
    %c0_i32 = arith.constant 0 : i32
    %c0_i32_0 = arith.constant 0 : i32
    %c0_i32_1 = arith.constant 0 : i32
    return %arg0, %c0_i32, %c0_i32_0 : i32, i32, i32
  }
}

</mosaic_0001>

<llo_original>
// kernel: tpu_custom_call.1
$region0: #{tpu_custom_call.1}
  #allocation0 [shape = 'u32[]', space=smem, size = 0x4, offset = 0x4, fixed_abs, tag = 'smem constant byte address 0x4 - core index']
  #allocation1 [shape = 'u32[144,128]{1,0:T(1,128)}', space=vmem, size = 0x12000, scoped, tag = 'internal scratch']
  %s0 = inlined_call_operand.hbm [shape: f32[16,128], index: 0, kind: input, shape index: {}]
  %s1 = inlined_call_operand.hbm [shape: f32[16,128], index: 1, kind: input, shape index: {}]
  %s2 = inlined_call_operand.hbm [shape: f32[1,8,128], index: 2, kind: output, shape index: {}]
  %s3 = sld [smem:[#allocation0]]
  $region30: #{tpu_custom_call.1} parent=0
    _
  %s5 = ssub.s32 1, %s3
  %s6 = scalar_select 0, %s5, %s3
  $region1: #{tpu_custom_call.1} parent=0
    #allocation2 [shape = 'u8[8192]{0}', space=vmem, size = 0x2000, scoped, tag = 'input window, operand 0, single buffered']
    #allocation3 [shape = 's32[1]{0}', space=sflag, size = 0x4, scoped, tag = 'scoped memory for tpu_custom_call.1']
    #allocation4 [shape = 's32[1]{0}', space=sflag, size = 0x4, scoped, tag = 'scoped memory for tpu_custom_call.1']
    #allocation5 [shape = 'u8[8192]{0}', space=vmem, size = 0x2000, scoped, tag = 'input window, operand 1, single buffered']
    #allocation6 [shape = 's32[1]{0}', space=sflag, size = 0x4, scoped, tag = 'scoped memory for tpu_custom_call.1']
    #allocation7 [shape = 'u8[4096]{0}', space=vmem, size = 0x1000, scoped, tag = 'output window, operand 0, single buffered']
    %7 = vsyncpa [#allocation3], 0
    %8 = vsyncpa [#allocation6], 0
    %9 = vsyncpa [#allocation4], 0
    // Predicated region
    $region2: #{tpu_custom_call.1} parent=1 // pred_check
      _
    $region3: #{tpu_custom_call.1} parent=1 // pred_check_branch
      %11 = sbr.rel (0) target = $region5
    $region4: #{tpu_custom_call.1} parent=1 // pred_region
      %s12 = sadd.s32 0, 0
      %p13 = scmp.lt.s32.totalorder %s12, 0
      %s14 = scalar_select %p13, %s12, 0
      %s15 = smul.u32 2, %s14
      %s17 = ssub.s32 256, 256
      %18 = vsyncadd [#allocation3], %s17
      %s19 = smul.addr %s15, 128
      %s20 = scalar_lea.hbm %s0, %s19
      %s21 = sshll.u32 [#allocation2], 4
      %s22 = int_to_ptr.vmem [resolvable:$true] %s21
      %27 = dma.hbm_to_vmem [thread:$0]  %s20, 256, %s22, [#allocation3], 128, 128, 8
    $region5: #{tpu_custom_call.1} parent=1 // pred_fallthru
      _
    // Predicated region
    $region6: #{tpu_custom_call.1} parent=1 // pred_check
      _
    $region7: #{tpu_custom_call.1} parent=1 // pred_check_branch
      %29 = sbr.rel (0) target = $region9
    $region8: #{tpu_custom_call.1} parent=1 // pred_region
      %s30 = sadd.s32 0, 0
      %p31 = scmp.lt.s32.totalorder %s30, 0
      %s32 = scalar_select %p31, %s30, 0
      %s33 = smul.u32 2, %s32
      %s35 = ssub.s32 256, 256
      %36 = vsyncadd [#allocation6], %s35
      %s37 = smul.addr %s33, 128
      %s38 = scalar_lea.hbm %s1, %s37
      %s39 = sshll.u32 [#allocation5], 4
      %s40 = int_to_ptr.vmem [resolvable:$true] %s39
      %45 = dma.hbm_to_vmem [thread:$0]  %s38, 256, %s40, [#allocation6], 128, 128, 8
    $region9: #{tpu_custom_call.1} parent=1 // pred_fallthru
      _
    // Predicated region
    $region10: #{tpu_custom_call.1} parent=1 // pred_check
      _
    $region11: #{tpu_custom_call.1} parent=1 // pred_check_branch
      %47 = sbr.rel (0) target = $region13
    $region12: #{tpu_custom_call.1} parent=1 // pred_region
      %48 = dma.done [#allocation3], 256
    $region13: #{tpu_custom_call.1} parent=1 // pred_fallthru
      _
    // Predicated region
    $region14: #{tpu_custom_call.1} parent=1 // pred_check
      _
    $region15: #{tpu_custom_call.1} parent=1 // pred_check_branch
      %50 = sbr.rel (0) target = $region17
    $region16: #{tpu_custom_call.1} parent=1 // pred_region
      %51 = dma.done [#allocation6], 256
    $region17: #{tpu_custom_call.1} parent=1 // pred_fallthru
      _
    %s52 = sadd.s32 0, 0
    %p53 = scmp.lt.s32.totalorder %s52, 0
    %s54 = scalar_select %p53, %s52, 0
    %s55 = smul.u32 2, %s54
    %s56 = sadd.s32 0, 0
    %p57 = scmp.lt.s32.totalorder %s56, 0
    %s58 = scalar_select %p57, %s56, 0
    %s59 = smul.u32 2, %s58
    %p60 = scmp.eq.s32.totalorder 0, 0
    // Predicated region
    $region18: #{tpu_custom_call.1} parent=1 // pred_check
      %p61 = pneg %p60
    $region19: #{tpu_custom_call.1} parent=1 // pred_check_branch
      %63 = sbr.rel (%p61) target = $region21
    $region20: #{tpu_custom_call.1} parent=1 // pred_region
      %64 = vst [vmem:[#allocation7] sm:$0xff] 0.0
    $region21: #{tpu_custom_call.1} parent=1 // pred_fallthru
      _
    %v65 = vld [vmem:[#allocation2] sm:$0xff]
    %v66 = vld [vmem:[#allocation2 + $0x8] sm:$0xff]
    %v67 = vld [vmem:[#allocation5] sm:$0xff]
    %v68 = vld [vmem:[#allocation5 + $0x8] sm:$0xff]
    %v69 = vsub.f32 %v65, %v67
    %v70 = vsub.f32 %v66, %v68
    %v71 = vmul.f32 %v69, %v69
    %v72 = vmul.f32 %v70, %v70
    %v73 = vld [vmem:[#allocation7] sm:$0xff]
    %v74 = vadd.f32 %v71, %v72
    %v75 = vadd.f32 %v73, %v74
    %76 = vst [vmem:[#allocation7] sm:$0xff] %v75
    // Predicated region
    $region22: #{tpu_custom_call.1} parent=1 // pred_check
      _
    $region23: #{tpu_custom_call.1} parent=1 // pred_check_branch
      %78 = sbr.rel (0) target = $region25
    $region24: #{tpu_custom_call.1} parent=1 // pred_region
      %s80 = ssub.s32 128, 128
      %81 = vsyncadd [#allocation4], %s80
      %s83 = sshll.u32 [#allocation7], 4
      %s84 = int_to_ptr.vmem [resolvable:$true] %s83
      %86 = dma.vmem_to_hbm [thread:$0]  %s84, 128, %s2, [#allocation4]
    $region25: #{tpu_custom_call.1} parent=1 // pred_fallthru
      _
    // Predicated region
    $region26: #{tpu_custom_call.1} parent=1 // pred_check
      _
    $region27: #{tpu_custom_call.1} parent=1 // pred_check_branch
      %88 = sbr.rel (0) target = $region29
    $region28: #{tpu_custom_call.1} parent=1 // pred_region
      %89 = dma.done [#allocation4], 128
    $region29: #{tpu_custom_call.1} parent=1 // pred_fallthru
      _
    %90 = vsyncpa [#allocation3], 1
    %91 = vsyncpa [#allocation6], 1
    %92 = vsyncpa [#allocation4], 1

</llo_original>
